<compile_context>
chip_gen: v7x
topology: tpu7x:2x2x1
jax: 0.10.0
libtpu: 0.0.40
codegen_flags: <defaults>
</compile_context>

<pallas_src>
import functools

import jax
import jax.numpy as jnp
from jax.experimental import pallas as pl
from jax.experimental.pallas import tpu as pltpu


def _cdiv(a, b):
    return -(-a // b)


def _vmem_capacity_bytes():
    # Trace-time hardware query; fall back to the smallest generation (v7x).
    try:
        return int(pltpu.get_tpu_info().vmem_capacity_bytes)
    except Exception:
        return 64 << 20


def _layernorm_kernel(x_ref, alpha_ref, beta_ref, o_ref, *, inv_h, inv_hm1):
    # x_ref: (TR, H) tile of rows; alpha/beta: (1, H) broadcast over rows.
    xf = x_ref[...].astype(jnp.float32)

    # Two-pass stats over the VMEM-resident tile: numerically robust (no
    # E[x^2]-E[x]^2 cancellation) and the centered tile is reused below.
    mean = jnp.sum(xf, axis=-1, keepdims=True) * jnp.float32(inv_h)
    d = xf - mean
    # Unbiased (N-1) variance, matching torch.Tensor.std default. No eps —
    # faithful to the module's forward.
    var = jnp.sum(d * d, axis=-1, keepdims=True) * jnp.float32(inv_hm1)
    inv_std = jax.lax.rsqrt(var)  # EUP op: replaces sqrt + full-tile divide.

    if jnp.dtype(o_ref.dtype) == jnp.dtype(jnp.bfloat16):
        # v7x: affine tail in packed bf16 halves the per-element VPU work
        # (stats and centering stay in f32 for accuracy).
        yn = (d * inv_std).astype(jnp.bfloat16)
        o_ref[...] = (yn * alpha_ref[...].astype(jnp.bfloat16)
                      + beta_ref[...].astype(jnp.bfloat16))
    else:
        alpha = alpha_ref[...].astype(jnp.float32)
        beta = beta_ref[...].astype(jnp.float32)
        o_ref[...] = (d * inv_std * alpha + beta).astype(o_ref.dtype)


def _choose_row_tile(rows, hidden, itemsize):
    # Sublane packing alignment: f32 -> 8 rows, bf16 -> 16, 8-bit -> 32.
    align = 8 if itemsize >= 4 else (16 if itemsize == 2 else 32)

    # ~40% of physical VMEM for tile sizing (≈48 MiB on v5e/v6e, ≈24 MiB v7x).
    vmem_budget = max(8 << 20, int(_vmem_capacity_bytes() * 0.4))
    # Per-element VMEM footprint: double-buffered input + output blocks in the
    # storage dtype plus ~2 f32 intermediates from the in-kernel upcast.
    per_elem = 4 * itemsize + 8
    tr_budget = vmem_budget // max(1, per_elem * hidden)

    # Byte-based block target (~8 MiB of input) instead of a fixed row cap,
    # so per-grid-step overhead (~0.35 us) stays negligible at small hidden.
    tr_target = (8 << 20) // max(1, hidden * itemsize)

    rows_aligned = _cdiv(rows, align) * align
    tr = min(tr_budget, tr_target, rows_aligned)
    tr = max(align, (tr // align) * align)

    # Megacore balance: at least 2 grid steps (and preferably an even count)
    # so v7x's two TensorCores both get equal work.
    if rows_aligned >= 2 * align:
        half = _cdiv(_cdiv(rows_aligned, 2), align) * align
        tr = min(tr, half)
    steps = _cdiv(rows, tr)
    if steps > 1 and steps % 2 == 1:
        for target_steps in (steps + 1, steps + 3):
            cand = max(align, _cdiv(_cdiv(rows, target_steps), align) * align)
            if _cdiv(rows, cand) % 2 == 0:
                tr = cand
                break
    return tr


@functools.partial(jax.jit, static_argnames=("row_tile",))
def layernorm_pallas(x, alpha, beta, row_tile=None):
    """x: (..., hidden); alpha, beta: (hidden,)."""
    orig_shape = x.shape
    hidden = orig_shape[-1]
    rows = 1
    for d in orig_shape[:-1]:
        rows *= d

    x2 = x.reshape(rows, hidden)
    alpha2 = alpha.reshape(1, hidden)
    beta2 = beta.reshape(1, hidden)

    itemsize = jnp.dtype(x.dtype).itemsize
    tr = int(row_tile) if row_tile is not None else _choose_row_tile(
        rows, hidden, itemsize)

    # No padding: ragged final block is masked by Pallas (per-row stats, so
    # valid rows are unaffected and OOB rows are never stored).
    grid = (_cdiv(rows, tr),)

    # VMEM request: double-buffered in+out blocks, ~2 f32 intermediates for
    # the upcast compute, alpha/beta and headroom; clamped to ~75% of the
    # physical VMEM of this generation (64 MiB on v7x, 128 MiB on v5e/v6e).
    block_elems = tr * hidden
    est = 4 * block_elems * itemsize + 2 * block_elems * 4 + (2 << 20)
    vmem_limit = int(min(_vmem_capacity_bytes() * 3 // 4, max(16 << 20, est)))

    kernel = functools.partial(
        _layernorm_kernel,
        inv_h=1.0 / hidden,
        inv_hm1=(1.0 / (hidden - 1)) if hidden > 1 else float("nan"),
    )

    # TODO(synk): add a chunked-hidden (second "arbitrary" grid axis with
    # running stats) fallback for hidden too large for one block, and a
    # transposed / packed-lane layout for hidden << 128 where masked stores
    # waste lane occupancy; neither affects the shapes exercised here.
    out2 = pl.pallas_call(
        kernel,
        out_shape=jax.ShapeDtypeStruct((rows, hidden), x.dtype),
        grid_spec=pltpu.PrefetchScalarGridSpec(
            num_scalar_prefetch=0,
            grid=grid,
            in_specs=[
                pl.BlockSpec((tr, hidden), lambda i: (i, 0)),
                pl.BlockSpec((1, hidden), lambda i: (0, 0)),
                pl.BlockSpec((1, hidden), lambda i: (0, 0)),
            ],
            out_specs=pl.BlockSpec((tr, hidden), lambda i: (i, 0)),
        ),
        compiler_params=pltpu.CompilerParams(
            dimension_semantics=("parallel",),
            vmem_limit_bytes=vmem_limit,
        ),
    )(x2, alpha2, beta2)

    return out2.reshape(orig_shape)


def _reference(x, alpha, beta):
    # Pure-JAX reference mirroring the PyTorch forward (unbiased std, no eps).
    x32 = x.astype(jnp.float32)
    mean = jnp.mean(x32, axis=-1, keepdims=True)
    var = jnp.sum((x32 - mean) ** 2, axis=-1, keepdims=True) / (x.shape[-1] - 1)
    std = jnp.sqrt(var)
    return ((x32 - mean) / std * alpha + beta).astype(x.dtype)


if __name__ == "__main__":
    batch, seq, hidden = 2, 8, 32

    key = jax.random.PRNGKey(0)
    kx, ka, kb = jax.random.split(key, 3)

    x = jax.random.normal(kx, (batch, seq, hidden), dtype=jnp.float32)
    # Deterministic stand-ins for nn.Parameter(torch.randn(hidden)).
    alpha = jax.random.normal(ka, (hidden,), dtype=jnp.float32)
    beta = jax.random.normal(kb, (hidden,), dtype=jnp.float32)

    out = layernorm_pallas(x, alpha, beta)
    out = jax.block_until_ready(out)

    ref = _reference(x, alpha, beta)
    assert out.shape == x.shape
    assert jnp.allclose(out, ref, atol=1e-5, rtol=1e-5), "mismatch vs reference"

    # Also exercise a ragged row count (rows % tile != 0) to cover the
    # no-padding masked-final-block path.
    x_odd = jax.random.normal(kx, (3, 7, hidden), dtype=jnp.float32)
    out_odd = jax.block_until_ready(layernorm_pallas(x_odd, alpha, beta))
    assert jnp.allclose(out_odd, _reference(x_odd, alpha, beta),
                        atol=1e-5, rtol=1e-5), "mismatch vs reference (ragged)"

    print("KERNEL_OK")
</pallas_src>

<mosaic_0001>
module attributes {stable_mosaic.version = 11 : i64} {
  func.func @_layernorm_kernel(%arg0: i32, %arg1: memref<8x32xf32, #tpu.memory_space<vmem>>, %arg2: memref<1x32xf32, #tpu.memory_space<vmem>>, %arg3: memref<1x32xf32, #tpu.memory_space<vmem>>, %arg4: memref<8x32xf32, #tpu.memory_space<vmem>>) attributes {dimension_semantics = [#tpu.dimension_semantics<parallel>], iteration_bounds = array<i64: 2>, scalar_prefetch = 0 : i64, scratch_operands = 0 : i64, tpu.core_type = #tpu.core_type<tc>, window_params = [{transform_indices = @transform_0, window_bounds = array<i64: 8, 32>}, {pipeline_mode = #tpu.pipeline_mode<synchronous>, transform_indices = @transform_1, window_bounds = array<i64: 1, 32>}, {pipeline_mode = #tpu.pipeline_mode<synchronous>, transform_indices = @transform_2, window_bounds = array<i64: 1, 32>}, {transform_indices = @transform_3, window_bounds = array<i64: 8, 32>}]} {
    %c0 = arith.constant 0 : index
    %c0_0 = arith.constant 0 : index
    %0 = vector.load %arg1[%c0, %c0_0] : memref<8x32xf32, #tpu.memory_space<vmem>>, vector<8x32xf32>
    %cst = arith.constant dense<0.000000e+00> : vector<8xf32>
    %1 = vector.multi_reduction <add>, %0, %cst [1] : vector<8x32xf32> to vector<8xf32>
    %2 = vector.shape_cast %1 : vector<8xf32> to vector<8x1xf32>
    %cst_1 = arith.constant 3.125000e-02 : f32
    %3 = vector.broadcast %cst_1 : f32 to vector<8x1xf32>
    %4 = arith.mulf %2, %3 : vector<8x1xf32>
    %5 = vector.broadcast %4 : vector<8x1xf32> to vector<8x32xf32>
    %6 = arith.subf %0, %5 : vector<8x32xf32>
    %7 = arith.mulf %6, %6 : vector<8x32xf32>
    %cst_2 = arith.constant dense<0.000000e+00> : vector<8xf32>
    %8 = vector.multi_reduction <add>, %7, %cst_2 [1] : vector<8x32xf32> to vector<8xf32>
    %9 = vector.shape_cast %8 : vector<8xf32> to vector<8x1xf32>
    %cst_3 = arith.constant 0.0322580636 : f32
    %10 = vector.broadcast %cst_3 : f32 to vector<8x1xf32>
    %11 = arith.mulf %9, %10 : vector<8x1xf32>
    %12 = math.rsqrt %11 : vector<8x1xf32>
    %c0_4 = arith.constant 0 : index
    %c0_5 = arith.constant 0 : index
    %13 = vector.load %arg2[%c0_4, %c0_5] : memref<1x32xf32, #tpu.memory_space<vmem>>, vector<1x32xf32>
    %c0_6 = arith.constant 0 : index
    %c0_7 = arith.constant 0 : index
    %14 = vector.load %arg3[%c0_6, %c0_7] : memref<1x32xf32, #tpu.memory_space<vmem>>, vector<1x32xf32>
    %15 = vector.broadcast %12 : vector<8x1xf32> to vector<8x32xf32>
    %16 = arith.mulf %6, %15 : vector<8x32xf32>
    %17 = vector.broadcast %13 : vector<1x32xf32> to vector<8x32xf32>
    %18 = arith.mulf %16, %17 : vector<8x32xf32>
    %19 = vector.broadcast %14 : vector<1x32xf32> to vector<8x32xf32>
    %20 = arith.addf %18, %19 : vector<8x32xf32>
    %c0_8 = arith.constant 0 : index
    %c0_9 = arith.constant 0 : index
    %21 = vector.load %arg4[%c0_8, %c0_9] : memref<8x32xf32, #tpu.memory_space<vmem>>, vector<8x32xf32>
    tpu.vector_store %arg4[%c0_8, %c0_9], %20 {strides = array<i32>} : memref<8x32xf32, #tpu.memory_space<vmem>>, vector<8x32xf32>,
    return
  }
  func.func @transform_0(%arg0: i32) -> (i32, i32) {
    %c0_i32 = arith.constant 0 : i32
    %c0_i32_0 = arith.constant 0 : i32
    return %arg0, %c0_i32 : i32, i32
  }
  func.func @transform_1(%arg0: i32) -> (i32, i32) {
    %c0_i32 = arith.constant 0 : i32
    %c0_i32_0 = arith.constant 0 : i32
    %c0_i32_1 = arith.constant 0 : i32
    return %c0_i32, %c0_i32_0 : i32, i32
  }
  func.func @transform_2(%arg0: i32) -> (i32, i32) {
    %c0_i32 = arith.constant 0 : i32
    %c0_i32_0 = arith.constant 0 : i32
    %c0_i32_1 = arith.constant 0 : i32
    return %c0_i32, %c0_i32_0 : i32, i32
  }
  func.func @transform_3(%arg0: i32) -> (i32, i32) {
    %c0_i32 = arith.constant 0 : i32
    %c0_i32_0 = arith.constant 0 : i32
    return %arg0, %c0_i32 : i32, i32
  }
}

</mosaic_0001>

<llo_original>
// kernel: layernorm_pallas.1
$region0: #{layernorm_pallas.1}
  #allocation0 [shape = 'u32[]', space=smem, size = 0x4, offset = 0x4, fixed_abs, tag = 'smem constant byte address 0x4 - core index']
  #allocation1 [shape = 'u32[144,128]{1,0:T(1,128)}', space=vmem, size = 0x12000, scoped, tag = 'internal scratch']
  %s0 = inlined_call_operand.hbm [shape: f32[16,32], index: 0, kind: input, shape index: {}]
  %s1 = inlined_call_operand.vmem [shape: f32[1,32], index: 1, kind: input, shape index: {}]
  %s2 = inlined_call_operand.vmem [shape: f32[1,32], index: 2, kind: input, shape index: {}]
  %s3 = inlined_call_operand.hbm [shape: f32[16,32], index: 3, kind: output, shape index: {}]
  %s4 = sld [smem:[#allocation0]]
  $region49: #{layernorm_pallas.1} parent=0
    _
  %s6 = ssub.s32 1, %s4
  %s7 = scalar_select 0, %s6, %s4
  $region1: #{layernorm_pallas.1} parent=0
    #allocation2 [shape = 'u8[8192]{0}', space=vmem, size = 0x2000, scoped, tag = 'input window, operand 0']
    #allocation3 [shape = 's32[2]{0}', space=sflag, size = 0x8, scoped, tag = 'scoped memory for layernorm_pallas.1']
    #allocation4 [shape = 's32[2]{0}', space=sflag, size = 0x8, scoped, tag = 'scoped memory for layernorm_pallas.1']
    #allocation5 [shape = 'u8[8192]{0}', space=vmem, size = 0x2000, scoped, tag = 'output window, operand 0']
    %8 = vsyncpa [#allocation3], 0
    %s9 = scalar_lea.sflag [#allocation3], 1
    %10 = vsyncpa %s9, 0
    %11 = vsyncpa [#allocation4], 0
    %s12 = scalar_lea.sflag [#allocation4], 1
    %13 = vsyncpa %s12, 0
    loop: start=0, step=1, limit=4
    $region2: #{layernorm_pallas.1} parent=1 // loop_pre_header
      _
    $region3: #{layernorm_pallas.1} parent=1 // loop_header
      %s15 = sphi 0, %s19
      %p16 = scmp.ge.s32.totalorder %s15, 4
      %s25 = sphi 0, %s27
      %s28 = sphi 0, %s25
      %s29 = sphi 0, %s28
      %s45 = sphi 0, %s29
      %s49 = sphi 0, %s49
      %s51 = sphi 0, %s49
      %s52 = sphi 0, %s51
      %s66 = sphi 0, %s52
      %s70 = sphi 0, %s70
      %s72 = sphi 0, %s70
      %s73 = sphi 0, %s72
      %s87 = sphi 0, %s73
      %s93 = sphi 0, %s95
      %s96 = sphi 0, %s93
      %s97 = sphi 0, %s96
      %s113 = sphi 0, %s97
    $region4: #{layernorm_pallas.1} parent=1 // loop_header_branch
      %18 = sbr.rel (%p16) target = $region8
    $region5: #{layernorm_pallas.1} parent=1 // loop_body
      %s20 = ssub.s32 %s15, 1
      %s21 = ssub.s32 %s15, 2
      %s22 = sadd.s32 %s15, 1
      %s23 = ssub.s32 %s15, %s22
      %p24 = scmp.eq.s32.totalorder %s23, 0
      %s26 = sadd.s32 %s25, 1
      %s27 = scalar_select %p24, %s25, %s26
      %p30 = pneg %p24
      %p31 = scmp.eq.s32.totalorder %s15, 1
      %p32 = por %p30, %p31
      %p33 = scmp.ne.s32.totalorder %s25, %s28
      %p34 = scmp.eq.s32.totalorder %s15, 0
      %p35 = por %p33, %p34
      %p36 = scmp.ne.s32.totalorder %s25, %s28
      %p37 = scmp.eq.s32.totalorder %s20, 1
      %p38 = por %p36, %p37
      %p39 = scmp.ne.s32.totalorder %s28, %s29
      %p40 = scmp.eq.s32.totalorder %s20, 0
      %p41 = por %p39, %p40
      %p42 = scmp.ne.s32.totalorder %s28, %s29
      %p43 = scmp.eq.s32.totalorder %s21, 1
      %p44 = por %p42, %p43
      %p46 = scmp.ne.s32.totalorder %s29, %s45
      %p47 = scmp.eq.s32.totalorder %s21, 0
      %p48 = por %p46, %p47
      %s50 = sadd.s32 %s49, 1
      %p53 = scmp.eq.s32.totalorder %s15, 1
      %p54 = scmp.ne.s32.totalorder %s49, %s51
      %p55 = scmp.eq.s32.totalorder %s15, 0
      %p56 = por %p54, %p55
      %p57 = scmp.ne.s32.totalorder %s49, %s51
      %p58 = scmp.eq.s32.totalorder %s20, 1
      %p59 = por %p57, %p58
      %p60 = scmp.ne.s32.totalorder %s51, %s52
      %p61 = scmp.eq.s32.totalorder %s20, 0
      %p62 = por %p60, %p61
      %p63 = scmp.ne.s32.totalorder %s51, %s52
      %p64 = scmp.eq.s32.totalorder %s21, 1
      %p65 = por %p63, %p64
      %p67 = scmp.ne.s32.totalorder %s52, %s66
      %p68 = scmp.eq.s32.totalorder %s21, 0
      %p69 = por %p67, %p68
      %s71 = sadd.s32 %s70, 1
      %p74 = scmp.eq.s32.totalorder %s15, 1
      %p75 = scmp.ne.s32.totalorder %s70, %s72
      %p76 = scmp.eq.s32.totalorder %s15, 0
      %p77 = por %p75, %p76
      %p78 = scmp.ne.s32.totalorder %s70, %s72
      %p79 = scmp.eq.s32.totalorder %s20, 1
      %p80 = por %p78, %p79
      %p81 = scmp.ne.s32.totalorder %s72, %s73
      %p82 = scmp.eq.s32.totalorder %s20, 0
      %p83 = por %p81, %p82
      %p84 = scmp.ne.s32.totalorder %s72, %s73
      %p85 = scmp.eq.s32.totalorder %s21, 1
      %p86 = por %p84, %p85
      %p88 = scmp.ne.s32.totalorder %s73, %s87
      %p89 = scmp.eq.s32.totalorder %s21, 0
      %p90 = por %p88, %p89
      %s91 = ssub.s32 %s15, %s22
      %p92 = scmp.eq.s32.totalorder %s91, 0
      %s94 = sadd.s32 %s93, 1
      %s95 = scalar_select %p92, %s93, %s94
      %p98 = pneg %p92
      %p99 = scmp.eq.s32.totalorder %s15, 1
      %p100 = por %p98, %p99
      %p101 = scmp.ne.s32.totalorder %s93, %s96
      %p102 = scmp.eq.s32.totalorder %s15, 0
      %p103 = por %p101, %p102
      %p104 = scmp.ne.s32.totalorder %s93, %s96
      %p105 = scmp.eq.s32.totalorder %s20, 1
      %p106 = por %p104, %p105
      %p107 = scmp.ne.s32.totalorder %s96, %s97
      %p108 = scmp.eq.s32.totalorder %s20, 0
      %p109 = por %p107, %p108
      %p110 = scmp.ne.s32.totalorder %s96, %s97
      %p111 = scmp.eq.s32.totalorder %s21, 1
      %p112 = por %p110, %p111
      %p114 = scmp.ne.s32.totalorder %s97, %s113
      %p115 = scmp.eq.s32.totalorder %s21, 0
      %p116 = por %p114, %p115
      %p117 = scmp.le.s32.totalorder 1, %s15
      %p118 = scmp.lt.s32.totalorder %s15, 3
      %p119 = pnand %p117, %p118
      %p120 = pneg %p119
      // Predicated region
      $region9: #{layernorm_pallas.1} parent=5 // pred_check
        _
      $region10: #{layernorm_pallas.1} parent=5 // pred_check_branch
        %122 = sbr.rel (%p119) target = $region12
      $region11: #{layernorm_pallas.1} parent=5 // pred_region
        %s123 = ssub.s32 %s15, 1
        // Predicated region
        $region13: #{layernorm_pallas.1} parent=11 // pred_check
          %p124 = pneg %p62
        $region14: #{layernorm_pallas.1} parent=11 // pred_check_branch
          %126 = sbr.rel (%p124) target = $region16
        $region15: #{layernorm_pallas.1} parent=11 // pred_region
          _
        $region16: #{layernorm_pallas.1} parent=11 // pred_fallthru
          _
        // Predicated region
        $region17: #{layernorm_pallas.1} parent=11 // pred_check
          %p127 = pneg %p83
        $region18: #{layernorm_pallas.1} parent=11 // pred_check_branch
          %129 = sbr.rel (%p127) target = $region20
        $region19: #{layernorm_pallas.1} parent=11 // pred_region
          _
        $region20: #{layernorm_pallas.1} parent=11 // pred_fallthru
          _
      $region12: #{layernorm_pallas.1} parent=5 // pred_fallthru
        _
      %p130 = scmp.lt.s32.totalorder %s15, 2
      // Predicated region
      $region21: #{layernorm_pallas.1} parent=5 // pred_check
        %p131 = pneg %p130
      $region22: #{layernorm_pallas.1} parent=5 // pred_check_branch
        %133 = sbr.rel (%p131) target = $region24
      $region23: #{layernorm_pallas.1} parent=5 // pred_region
        // Predicated region
        $region25: #{layernorm_pallas.1} parent=23 // pred_check
          %p134 = pneg %p35
        $region26: #{layernorm_pallas.1} parent=23 // pred_check_branch
          %136 = sbr.rel (%p134) target = $region28
        $region27: #{layernorm_pallas.1} parent=23 // pred_region
          %s137 = sand.u32 %s25, 1
          %s138 = scalar_lea.sflag [#allocation3], %s137
          %s139 = sand.u32 %s25, 1
          %s140 = smul.addr %s139, 8
          %s141 = scalar_lea.vmem [#allocation2], %s140
          %s143 = ssub.s32 128, 128
          %144 = vsyncadd %s138, %s143
          %s145 = smul.addr %s15, 128
          %s146 = scalar_lea.hbm %s0, %s145
          %s148 = sshll.u32 %s141, 4
          %s149 = int_to_ptr.vmem [resolvable:$true] %s148
          %151 = dma.hbm_to_vmem [thread:$0]  %s146, 128, %s149, %s138
        $region28: #{layernorm_pallas.1} parent=23 // pred_fallthru
          _
      $region24: #{layernorm_pallas.1} parent=5 // pred_fallthru
        _
      %p152 = scmp.le.s32.totalorder 1, %s15
      %p153 = scmp.lt.s32.totalorder %s15, 3
      %p154 = pnand %p152, %p153
      %p155 = pneg %p154
      // Predicated region
      $region29: #{layernorm_pallas.1} parent=5 // pred_check
        _
      $region30: #{layernorm_pallas.1} parent=5 // pred_check_branch
        %157 = sbr.rel (%p154) target = $region32
      $region31: #{layernorm_pallas.1} parent=5 // pred_region
        %s158 = ssub.s32 %s15, 1
        %s159 = sand.u32 %s28, 1
        %s160 = scalar_lea.sflag [#allocation3], %s159
        %s161 = sand.u32 %s28, 1
        %s162 = smul.addr %s161, 8
        %s163 = scalar_lea.vmem [#allocation2], %s162
        // Predicated region
        $region33: #{layernorm_pallas.1} parent=31 // pred_check
          %p164 = pneg %p41
        $region34: #{layernorm_pallas.1} parent=31 // pred_check_branch
          %166 = sbr.rel (%p164) target = $region36
        $region35: #{layernorm_pallas.1} parent=31 // pred_region
          %167 = dma.done %s160, 128
        $region36: #{layernorm_pallas.1} parent=31 // pred_fallthru
          _
        %s168 = sand.u32 %s28, 1
        %s169 = scalar_lea.sflag [#allocation3], %s168
        %s170 = sand.u32 %s28, 1
        %s171 = smul.addr %s170, 8
        %s172 = scalar_lea.vmem [#allocation2], %s171
        %p173 = pneg %p41
        %p174 = pneg %p38
        %p175 = pneg %p62
        %p176 = pneg %p59
        %p177 = pneg %p83
        %p178 = pneg %p80
        %p179 = pneg %p109
        %p180 = pneg %p106
        %s181 = sand.u32 %s96, 1
        %s182 = scalar_lea.sflag [#allocation4], %s181
        %s183 = sand.u32 %s96, 1
        %s184 = smul.addr %s183, 8
        %s185 = scalar_lea.vmem [#allocation5], %s184
        %v186 = vld [vmem:[%s163] sm:$0xff]
        %vm187 = vcmask 261120
        %v188 = vsel %vm187, %v186, 0.0
        %189 = vadd.xlane.f32.xlu0 %v188
        %v190 = vpop.xlane.xlu0 %189
        %v191 = vmul.f32 %v190, 0.03125
        %v192 = vsub.f32 %v186, %v191
        %v193 = vmul.f32 %v192, %v192
        %v194 = vsel %vm187, %v193, 0.0
        %195 = vadd.xlane.f32.xlu0 %v194
        %v196 = vpop.xlane.xlu0 %195
        %v197 = vmul.f32 %v196, 0.032258064
        %v198 = vrsqrt.pop %v197
        %v199 = vld [vmem:[%s1] sm:$0x1]
        %v200 = vld [vmem:[%s2] sm:$0x1]
        %v201 = vmul.f32 %v192, %v198
        %v203 = vlaneseq
        %v204 = vshrl.u32 %v203, 7
        %v205 = vsub.s32 0, %v204
        %v206 = vrot.slane %v199, %v205
        %v208 = vmul.f32 %v201, %v206
        %v210 = vlaneseq
        %v211 = vshrl.u32 %v210, 7
        %v212 = vsub.s32 0, %v211
        %v213 = vrot.slane %v200, %v212
        %v215 = vadd.f32 %v208, %v213
        %216 = vst.msk [vmem:[%s185] sm:$0xff] %vm187, %v215
        %s217 = sand.u32 %s96, 1
        %s218 = scalar_lea.sflag [#allocation4], %s217
        %s219 = sand.u32 %s96, 1
        %s220 = smul.addr %s219, 8
        %s221 = scalar_lea.vmem [#allocation5], %s220
        // Predicated region
        $region37: #{layernorm_pallas.1} parent=31 // pred_check
          %p222 = pneg %p106
        $region38: #{layernorm_pallas.1} parent=31 // pred_check_branch
          %224 = sbr.rel (%p222) target = $region40
        $region39: #{layernorm_pallas.1} parent=31 // pred_region
          %s226 = ssub.s32 128, 128
          %227 = vsyncadd %s218, %s226
          %s228 = smul.addr %s20, 128
          %s229 = scalar_lea.hbm %s3, %s228
          %s231 = sshll.u32 %s221, 4
          %s232 = int_to_ptr.vmem [resolvable:$true] %s231
          %234 = dma.vmem_to_hbm [thread:$0]  %s232, 128, %s229, %s218
        $region40: #{layernorm_pallas.1} parent=31 // pred_fallthru
          _
      $region32: #{layernorm_pallas.1} parent=5 // pred_fallthru
        _
      %p235 = scmp.le.s32.totalorder 2, %s15
      // Predicated region
      $region41: #{layernorm_pallas.1} parent=5 // pred_check
        %p236 = pneg %p235
      $region42: #{layernorm_pallas.1} parent=5 // pred_check_branch
        %238 = sbr.rel (%p236) target = $region44
      $region43: #{layernorm_pallas.1} parent=5 // pred_region
        %s239 = ssub.s32 %s15, 2
        // Predicated region
        $region45: #{layernorm_pallas.1} parent=43 // pred_check
          %p240 = pneg %p112
        $region46: #{layernorm_pallas.1} parent=43 // pred_check_branch
          %242 = sbr.rel (%p240) target = $region48
        $region47: #{layernorm_pallas.1} parent=43 // pred_region
          %s243 = sand.u32 %s97, 1
          %s244 = scalar_lea.sflag [#allocation4], %s243
          %s245 = sand.u32 %s97, 1
          %s246 = smul.addr %s245, 8
          %s247 = scalar_lea.vmem [#allocation5], %s246
          %248 = dma.done %s244, 128
        $region48: #{layernorm_pallas.1} parent=43 // pred_fallthru
          _
      $region44: #{layernorm_pallas.1} parent=5 // pred_fallthru
        _
    $region6: #{layernorm_pallas.1} parent=1 // loop_footer
      %s19 = sadd.s32 1, %s15
    $region7: #{layernorm_pallas.1} parent=1 // loop_footer_branch
      %14 = sbr.rel target = $region3
    $region8: #{layernorm_pallas.1} parent=1 // loop_exit
      _
    %249 = vsyncpa [#allocation3], 1
    %s250 = scalar_lea.sflag [#allocation3], 1
    %251 = vsyncpa %s250, 1
    %252 = vsyncpa [#allocation4], 1
    %s253 = scalar_lea.sflag [#allocation4], 1
    %254 = vsyncpa %s253, 1

</llo_original>
